<compile_context>
chip_gen: v7x
topology: tpu7x:2x2x1
jax: 0.10.0
libtpu: 0.0.40
codegen_flags: <defaults>
</compile_context>

<pallas_src>
import jax
import jax.numpy as jnp
from jax.experimental import pallas as pl
from jax.experimental.pallas import tpu as pltpu


# ----------------------------------------------------------------------------
# Pallas kernel: Bt batch elements per grid step
# ----------------------------------------------------------------------------
def _gc_kernel(x_ref, w1_ref, w2t_ref, b2_ref, g_ref, beta_ref, w3t_ref,
               b3_ref, o_ref):
    """Fused GC block over a (Bt, C, S) batch tile.

    x_ref   : (Bt, C, S) input features, S = W*H on the lane axis
    w1_ref  : (1, C)     conv1 weight (1x1, C->1)  (bias is softmax-invariant)
    w2t_ref : (C, M)     conv2 weight, pre-transposed    b2_ref  : (1, M)
    g_ref   : (1, M)     LayerNorm gamma                 beta_ref: (1, M)
    w3t_ref : (M, C)     conv3 weight, pre-transposed    b3_ref  : (1, C)
    o_ref   : (Bt, C, S) output = x + broadcast(z)
    """
    Bt = x_ref.shape[0]

    # conv1 (1x1, C->1): per-batch (1,C)@(C,S) logits on the MXU
    # (keeps VPU/XLU slack so the compute phase hides under the tile DMA).
    w1b = jnp.broadcast_to(w1_ref[...][None], (Bt, 1, w1_ref.shape[1]))
    logits = jnp.einsum('bzc,bcs->bzs', w1b, x_ref[...],
                        preferred_element_type=jnp.float32)          # (Bt,1,S)
    # NOTE: conv1 bias intentionally dropped - softmax is shift-invariant.

    # softmax over the spatial (lane) axis, f32
    m = jnp.max(logits, axis=-1, keepdims=True)
    e = jnp.exp(logits - m)
    attn = e / jnp.sum(e, axis=-1, keepdims=True)                    # (Bt,1,S)

    # context vector on the MXU: per-batch (C,S) contracted against (1,S)
    ctx = jnp.einsum('bcs,bzs->bcz', x_ref[...], attn,
                     preferred_element_type=jnp.float32)[..., 0]     # (Bt,C)

    # conv2 (C->M) batched over Bt, LayerNorm over the M channels, ReLU
    y = jnp.dot(ctx, w2t_ref[...],
                preferred_element_type=jnp.float32) + b2_ref[...]    # (Bt,M)
    mu = jnp.mean(y, axis=-1, keepdims=True)
    var = jnp.mean((y - mu) * (y - mu), axis=-1, keepdims=True)
    y = (y - mu) * jax.lax.rsqrt(var + 1e-5)
    y = y * g_ref[...] + beta_ref[...]
    y = jnp.maximum(y, 0.0)

    # conv3 (M->C) batched over Bt, then broadcast residual add over S lanes.
    z = jnp.dot(y, w3t_ref[...],
                preferred_element_type=jnp.float32) + b3_ref[...]    # (Bt,C)
    # x is re-read from the ref (bounded live range; VMEM reloads are cheap).
    o_ref[...] = (x_ref[...] + z[:, :, None]).astype(o_ref.dtype)


# ----------------------------------------------------------------------------
# Wrapper
# ----------------------------------------------------------------------------
def gc_forward(params, x_nchw, *, target_tile_bytes=2 << 20, min_steps=4):
    B, C, W, H = x_nchw.shape
    S = W * H
    M = params['w2'].shape[0]
    x = x_nchw.reshape(B, C, S).astype(jnp.float32)

    # --- choose the per-step batch tile Bt -----------------------------------
    # Aim for ~1-2 MiB input tiles (measured HBM-roofline sweet spot) while
    # keeping at least `min_steps` grid steps so the pipeline / both v7x cores
    # have work to overlap.  in+out double-buffered tiles stay well inside the
    # default scoped-VMEM limit on v5e/v6e/v7x.
    per_batch_bytes = C * S * 4
    Bt = max(1, min(B, target_tile_bytes // per_batch_bytes))
    if B // Bt < min_steps and B >= min_steps:
        Bt = max(1, B // min_steps)
    Bp = ((B + Bt - 1) // Bt) * Bt
    if Bp != B:
        x = jnp.pad(x, ((0, Bp - B), (0, 0), (0, 0)))

    # Parameters re-laid out once (outside the kernel): lane-dense rows and
    # pre-transposed weight matrices so the in-kernel matmuls need no .T.
    f32 = jnp.float32
    w1 = params['w1'].reshape(1, C).astype(f32)      # (1, C)
    w2t = params['w2'].T.astype(f32)                 # (C, M)
    b2 = params['b2'].reshape(1, M).astype(f32)      # (1, M)
    g = params['ln_g'].reshape(1, M).astype(f32)     # (1, M)
    beta = params['ln_b'].reshape(1, M).astype(f32)  # (1, M)
    w3t = params['w3'].T.astype(f32)                 # (M, C)
    b3 = params['b3'].reshape(1, C).astype(f32)      # (1, C)

    const = lambda b: (0, 0)   # params: same (whole-array) block every step

    # advisory cost hint for the XLA scheduler
    flops = B * (5 * C * S + 4 * C * M + 10 * S + 10 * M)
    cost = pl.CostEstimate(flops=flops, transcendentals=B * S,
                           bytes_accessed=2 * Bp * C * S * 4)

    out = pl.pallas_call(
        _gc_kernel,
        out_shape=jax.ShapeDtypeStruct((Bp, C, S), jnp.float32),
        grid_spec=pltpu.PrefetchScalarGridSpec(
            num_scalar_prefetch=0,
            grid=(Bp // Bt,),
            in_specs=[
                pl.BlockSpec((Bt, C, S), lambda b: (b, 0, 0)),  # x batch tile
                pl.BlockSpec((1, C), const),    # conv1 weight
                pl.BlockSpec((C, M), const),    # conv2 weight (pre-transposed)
                pl.BlockSpec((1, M), const),    # conv2 bias
                pl.BlockSpec((1, M), const),    # LayerNorm gamma
                pl.BlockSpec((1, M), const),    # LayerNorm beta
                pl.BlockSpec((M, C), const),    # conv3 weight (pre-transposed)
                pl.BlockSpec((1, C), const),    # conv3 bias
            ],
            out_specs=pl.BlockSpec((Bt, C, S), lambda b: (b, 0, 0)),
        ),
        compiler_params=pltpu.CompilerParams(
            dimension_semantics=("parallel",)),
        cost_estimate=cost,
    )(x, w1, w2t, b2, g, beta, w3t, b3)

    if Bp != B:
        out = out[:B]
    return out.reshape(B, C, W, H)


# ----------------------------------------------------------------------------
# Pure-JAX reference (mirrors the PyTorch module exactly, incl. conv1 bias)
# ----------------------------------------------------------------------------
def gc_reference(params, x_nchw):
    B, C, W, H = x_nchw.shape
    S = W * H
    x = x_nchw.reshape(B, C, S).astype(jnp.float32)
    logits = jnp.einsum('co,bcs->bs', params['w1'], x) + params['b1'][0, 0]
    attn = jax.nn.softmax(logits, axis=-1)                         # (B, S)
    ctx = jnp.einsum('bcs,bs->bc', x, attn)                        # (B, C)
    y = ctx @ params['w2'].T + params['b2'][:, 0]                  # (B, M)
    mu = jnp.mean(y, axis=-1, keepdims=True)
    var = jnp.mean((y - mu) ** 2, axis=-1, keepdims=True)
    y = (y - mu) / jnp.sqrt(var + 1e-5)
    y = y * params['ln_g'][:, 0] + params['ln_b'][:, 0]
    y = jnp.maximum(y, 0.0)
    z = y @ params['w3'].T + params['b3'][:, 0]                    # (B, C)
    return (x + z[:, :, None]).reshape(B, C, W, H)


# ----------------------------------------------------------------------------
# Deterministic synthetic parameters (PyTorch-style init shapes/scales)
# ----------------------------------------------------------------------------
def init_params(key, in_channel=64, ratio=2):
    mid = in_channel // ratio
    ks = jax.random.split(key, 6)

    def u(k, shape, fan_in):
        bound = 1.0 / (fan_in ** 0.5)
        return jax.random.uniform(k, shape, jnp.float32, -bound, bound)

    return {
        'w1': u(ks[0], (in_channel, 1), in_channel),   # conv1 weight (C->1)
        'b1': u(ks[1], (1, 1), in_channel),            # conv1 bias
        'w2': u(ks[2], (mid, in_channel), in_channel), # conv2 weight (C->M)
        'b2': u(ks[3], (mid, 1), in_channel),          # conv2 bias
        'ln_g': jnp.ones((mid, 1), jnp.float32),       # LayerNorm weight
        'ln_b': jnp.zeros((mid, 1), jnp.float32),      # LayerNorm bias
        'w3': u(ks[4], (in_channel, mid), mid),        # conv3 weight (M->C)
        'b3': u(ks[5], (in_channel, 1), mid),          # conv3 bias
    }


if __name__ == "__main__":
    key = jax.random.PRNGKey(0)
    pkey, xkey1, xkey2 = jax.random.split(key, 3)

    in_channel, ratio = 64, 2                       # module defaults
    params = init_params(pkey, in_channel, ratio)
    fwd = jax.jit(gc_forward)

    # Case 1: module-default small shape (single grid step).
    x1 = jax.random.normal(xkey1, (2, in_channel, 16, 16), jnp.float32)
    out1 = jax.block_until_ready(fwd(params, x1))
    ref1 = gc_reference(params, x1)
    assert out1.shape == x1.shape
    assert bool(jnp.all(jnp.isfinite(out1)))
    assert bool(jnp.allclose(out1, ref1, rtol=1e-4, atol=1e-4)), \
        float(jnp.max(jnp.abs(out1 - ref1)))

    # Case 2: larger batch -> Bt>1 batch tiles, multi-step grid, batch padding.
    x2 = jax.random.normal(xkey2, (34, in_channel, 16, 16), jnp.float32)
    out2 = jax.block_until_ready(fwd(params, x2))
    ref2 = gc_reference(params, x2)
    assert out2.shape == x2.shape
    assert bool(jnp.all(jnp.isfinite(out2)))
    assert bool(jnp.allclose(out2, ref2, rtol=1e-4, atol=1e-4)), \
        float(jnp.max(jnp.abs(out2 - ref2)))

    print("KERNEL_OK")
</pallas_src>

<mosaic_0001>
module attributes {stable_mosaic.version = 11 : i64} {
  func.func @_gc_kernel(%arg0: i32, %arg1: memref<2x64x256xf32, #tpu.memory_space<vmem>>, %arg2: memref<1x64xf32, #tpu.memory_space<vmem>>, %arg3: memref<64x32xf32, #tpu.memory_space<vmem>>, %arg4: memref<1x32xf32, #tpu.memory_space<vmem>>, %arg5: memref<1x32xf32, #tpu.memory_space<vmem>>, %arg6: memref<1x32xf32, #tpu.memory_space<vmem>>, %arg7: memref<32x64xf32, #tpu.memory_space<vmem>>, %arg8: memref<1x64xf32, #tpu.memory_space<vmem>>, %arg9: memref<2x64x256xf32, #tpu.memory_space<vmem>>) attributes {dimension_semantics = [#tpu.dimension_semantics<parallel>], iteration_bounds = array<i64: 1>, scalar_prefetch = 0 : i64, scratch_operands = 0 : i64, tpu.core_type = #tpu.core_type<tc>, window_params = [{transform_indices = @transform_0, window_bounds = array<i64: 2, 64, 256>}, {pipeline_mode = #tpu.pipeline_mode<synchronous>, transform_indices = @transform_1, window_bounds = array<i64: 1, 64>}, {pipeline_mode = #tpu.pipeline_mode<synchronous>, transform_indices = @transform_2, window_bounds = array<i64: 64, 32>}, {pipeline_mode = #tpu.pipeline_mode<synchronous>, transform_indices = @transform_3, window_bounds = array<i64: 1, 32>}, {pipeline_mode = #tpu.pipeline_mode<synchronous>, transform_indices = @transform_4, window_bounds = array<i64: 1, 32>}, {pipeline_mode = #tpu.pipeline_mode<synchronous>, transform_indices = @transform_5, window_bounds = array<i64: 1, 32>}, {pipeline_mode = #tpu.pipeline_mode<synchronous>, transform_indices = @transform_6, window_bounds = array<i64: 32, 64>}, {pipeline_mode = #tpu.pipeline_mode<synchronous>, transform_indices = @transform_7, window_bounds = array<i64: 1, 64>}, {transform_indices = @transform_8, window_bounds = array<i64: 2, 64, 256>}]} {
    %c0 = arith.constant 0 : index
    %c0_0 = arith.constant 0 : index
    %0 = vector.load %arg2[%c0, %c0_0] : memref<1x64xf32, #tpu.memory_space<vmem>>, vector<1x64xf32>
    %1 = vector.shape_cast %0 : vector<1x64xf32> to vector<1x1x64xf32>
    %2 = vector.shape_cast %1 : vector<1x1x64xf32> to vector<1x1x64xf32>
    %3 = vector.broadcast %2 : vector<1x1x64xf32> to vector<2x1x64xf32>
    %c0_1 = arith.constant 0 : index
    %c0_2 = arith.constant 0 : index
    %c0_3 = arith.constant 0 : index
    %4 = vector.load %arg1[%c0_1, %c0_2, %c0_3] : memref<2x64x256xf32, #tpu.memory_space<vmem>>, vector<2x64x256xf32>
    "tpu.trace_start"() <{level = 10 : i32, message = "bzc,bcs->bzs"}> : () -> ()
    %cst = arith.constant dense<0.000000e+00> : vector<2x1x256xf32>
    %5 = tpu.matmul %3, %4, %cst {dimension_numbers = #tpu.dot_dimension_numbers<[2], [1], [1], [2], [0, 0, 0, 1, 1, 2], [0], [0]>} : vector<2x1x64xf32>, vector<2x64x256xf32>, vector<2x1x256xf32> -> vector<2x1x256xf32>
    "tpu.trace_stop"() : () -> ()
    %cst_4 = arith.constant dense<0xFF800000> : vector<2x1xf32>
    %6 = vector.multi_reduction <maximumf>, %5, %cst_4 [2] : vector<2x1x256xf32> to vector<2x1xf32>
    %7 = vector.shape_cast %6 : vector<2x1xf32> to vector<2x1x1xf32>
    %8 = vector.broadcast %7 : vector<2x1x1xf32> to vector<2x1x256xf32>
    %9 = arith.subf %5, %8 : vector<2x1x256xf32>
    %10 = math.exp %9 : vector<2x1x256xf32>
    %cst_5 = arith.constant dense<0.000000e+00> : vector<2x1xf32>
    %11 = vector.multi_reduction <add>, %10, %cst_5 [2] : vector<2x1x256xf32> to vector<2x1xf32>
    %12 = vector.shape_cast %11 : vector<2x1xf32> to vector<2x1x1xf32>
    %13 = vector.broadcast %12 : vector<2x1x1xf32> to vector<2x1x256xf32>
    %14 = arith.divf %10, %13 : vector<2x1x256xf32>
    %c0_6 = arith.constant 0 : index
    %c0_7 = arith.constant 0 : index
    %c0_8 = arith.constant 0 : index
    %15 = vector.load %arg1[%c0_6, %c0_7, %c0_8] : memref<2x64x256xf32, #tpu.memory_space<vmem>>, vector<2x64x256xf32>
    "tpu.trace_start"() <{level = 10 : i32, message = "bcs,bzs->bcz"}> : () -> ()
    %cst_9 = arith.constant dense<0.000000e+00> : vector<2x64x1xf32>
    %16 = tpu.matmul %15, %14, %cst_9 {dimension_numbers = #tpu.dot_dimension_numbers<[2], [2], [1], [1], [0, 0, 0, 1, 1, 1], [0], [0]>} : vector<2x64x256xf32>, vector<2x1x256xf32>, vector<2x64x1xf32> -> vector<2x64x1xf32>
    "tpu.trace_stop"() : () -> ()
    %17 = vector.shape_cast %16 : vector<2x64x1xf32> to vector<2x64xf32>
    %c0_10 = arith.constant 0 : index
    %c0_11 = arith.constant 0 : index
    %18 = vector.load %arg3[%c0_10, %c0_11] : memref<64x32xf32, #tpu.memory_space<vmem>>, vector<64x32xf32>
    %cst_12 = arith.constant dense<0.000000e+00> : vector<2x32xf32>
    %19 = tpu.matmul %17, %18, %cst_12 {dimension_numbers = #tpu.dot_dimension_numbers<[1], [0], [0], [1], [0, 0, 1, 1], [], []>} : vector<2x64xf32>, vector<64x32xf32>, vector<2x32xf32> -> vector<2x32xf32>
    %c0_13 = arith.constant 0 : index
    %c0_14 = arith.constant 0 : index
    %20 = vector.load %arg4[%c0_13, %c0_14] : memref<1x32xf32, #tpu.memory_space<vmem>>, vector<1x32xf32>
    %21 = vector.broadcast %20 : vector<1x32xf32> to vector<2x32xf32>
    %22 = arith.addf %19, %21 : vector<2x32xf32>
    %cst_15 = arith.constant dense<0.000000e+00> : vector<2xf32>
    %23 = vector.multi_reduction <add>, %22, %cst_15 [1] : vector<2x32xf32> to vector<2xf32>
    %24 = vector.shape_cast %23 : vector<2xf32> to vector<2x1xf32>
    %cst_16 = arith.constant 3.200000e+01 : f32
    %25 = vector.broadcast %cst_16 : f32 to vector<2x1xf32>
    %26 = arith.divf %24, %25 : vector<2x1xf32>
    %27 = vector.broadcast %26 : vector<2x1xf32> to vector<2x32xf32>
    %28 = arith.subf %22, %27 : vector<2x32xf32>
    %29 = vector.broadcast %26 : vector<2x1xf32> to vector<2x32xf32>
    %30 = arith.subf %22, %29 : vector<2x32xf32>
    %31 = arith.mulf %28, %30 : vector<2x32xf32>
    %cst_17 = arith.constant dense<0.000000e+00> : vector<2xf32>
    %32 = vector.multi_reduction <add>, %31, %cst_17 [1] : vector<2x32xf32> to vector<2xf32>
    %33 = vector.shape_cast %32 : vector<2xf32> to vector<2x1xf32>
    %cst_18 = arith.constant 3.200000e+01 : f32
    %34 = vector.broadcast %cst_18 : f32 to vector<2x1xf32>
    %35 = arith.divf %33, %34 : vector<2x1xf32>
    %36 = vector.broadcast %26 : vector<2x1xf32> to vector<2x32xf32>
    %37 = arith.subf %22, %36 : vector<2x32xf32>
    %cst_19 = arith.constant 9.99999974E-6 : f32
    %38 = vector.broadcast %cst_19 : f32 to vector<2x1xf32>
    %39 = arith.addf %35, %38 : vector<2x1xf32>
    %40 = math.rsqrt %39 : vector<2x1xf32>
    %41 = vector.broadcast %40 : vector<2x1xf32> to vector<2x32xf32>
    %42 = arith.mulf %37, %41 : vector<2x32xf32>
    %c0_20 = arith.constant 0 : index
    %c0_21 = arith.constant 0 : index
    %43 = vector.load %arg5[%c0_20, %c0_21] : memref<1x32xf32, #tpu.memory_space<vmem>>, vector<1x32xf32>
    %44 = vector.broadcast %43 : vector<1x32xf32> to vector<2x32xf32>
    %45 = arith.mulf %42, %44 : vector<2x32xf32>
    %c0_22 = arith.constant 0 : index
    %c0_23 = arith.constant 0 : index
    %46 = vector.load %arg6[%c0_22, %c0_23] : memref<1x32xf32, #tpu.memory_space<vmem>>, vector<1x32xf32>
    %47 = vector.broadcast %46 : vector<1x32xf32> to vector<2x32xf32>
    %48 = arith.addf %45, %47 : vector<2x32xf32>
    %cst_24 = arith.constant 0.000000e+00 : f32
    %49 = vector.broadcast %cst_24 : f32 to vector<2x32xf32>
    %50 = arith.maximumf %48, %49 : vector<2x32xf32>
    %c0_25 = arith.constant 0 : index
    %c0_26 = arith.constant 0 : index
    %51 = vector.load %arg7[%c0_25, %c0_26] : memref<32x64xf32, #tpu.memory_space<vmem>>, vector<32x64xf32>
    %cst_27 = arith.constant dense<0.000000e+00> : vector<2x64xf32>
    %52 = tpu.matmul %50, %51, %cst_27 {dimension_numbers = #tpu.dot_dimension_numbers<[1], [0], [0], [1], [0, 0, 1, 1], [], []>} : vector<2x32xf32>, vector<32x64xf32>, vector<2x64xf32> -> vector<2x64xf32>
    %c0_28 = arith.constant 0 : index
    %c0_29 = arith.constant 0 : index
    %53 = vector.load %arg8[%c0_28, %c0_29] : memref<1x64xf32, #tpu.memory_space<vmem>>, vector<1x64xf32>
    %54 = vector.broadcast %53 : vector<1x64xf32> to vector<2x64xf32>
    %55 = arith.addf %52, %54 : vector<2x64xf32>
    %c0_30 = arith.constant 0 : index
    %c0_31 = arith.constant 0 : index
    %c0_32 = arith.constant 0 : index
    %56 = vector.load %arg1[%c0_30, %c0_31, %c0_32] : memref<2x64x256xf32, #tpu.memory_space<vmem>>, vector<2x64x256xf32>
    %57 = vector.shape_cast %55 : vector<2x64xf32> to vector<2x64x1xf32>
    %58 = vector.broadcast %57 : vector<2x64x1xf32> to vector<2x64x256xf32>
    %59 = arith.addf %56, %58 : vector<2x64x256xf32>
    %c0_33 = arith.constant 0 : index
    %c0_34 = arith.constant 0 : index
    %c0_35 = arith.constant 0 : index
    %60 = vector.load %arg9[%c0_33, %c0_34, %c0_35] : memref<2x64x256xf32, #tpu.memory_space<vmem>>, vector<2x64x256xf32>
    tpu.vector_store %arg9[%c0_33, %c0_34, %c0_35], %59 {strides = array<i32>} : memref<2x64x256xf32, #tpu.memory_space<vmem>>, vector<2x64x256xf32>,
    return
  }
  func.func @transform_0(%arg0: i32) -> (i32, i32, i32) {
    %c0_i32 = arith.constant 0 : i32
    %c0_i32_0 = arith.constant 0 : i32
    %c0_i32_1 = arith.constant 0 : i32
    return %arg0, %c0_i32, %c0_i32_0 : i32, i32, i32
  }
  func.func @transform_1(%arg0: i32) -> (i32, i32) {
    %c0_i32 = arith.constant 0 : i32
    %c0_i32_0 = arith.constant 0 : i32
    %c0_i32_1 = arith.constant 0 : i32
    return %c0_i32, %c0_i32_0 : i32, i32
  }
  func.func @transform_2(%arg0: i32) -> (i32, i32) {
    %c0_i32 = arith.constant 0 : i32
    %c0_i32_0 = arith.constant 0 : i32
    %c0_i32_1 = arith.constant 0 : i32
    return %c0_i32, %c0_i32_0 : i32, i32
  }
  func.func @transform_3(%arg0: i32) -> (i32, i32) {
    %c0_i32 = arith.constant 0 : i32
    %c0_i32_0 = arith.constant 0 : i32
    %c0_i32_1 = arith.constant 0 : i32
    return %c0_i32, %c0_i32_0 : i32, i32
  }
  func.func @transform_4(%arg0: i32) -> (i32, i32) {
    %c0_i32 = arith.constant 0 : i32
    %c0_i32_0 = arith.constant 0 : i32
    %c0_i32_1 = arith.constant 0 : i32
    return %c0_i32, %c0_i32_0 : i32, i32
  }
  func.func @transform_5(%arg0: i32) -> (i32, i32) {
    %c0_i32 = arith.constant 0 : i32
    %c0_i32_0 = arith.constant 0 : i32
    %c0_i32_1 = arith.constant 0 : i32
    return %c0_i32, %c0_i32_0 : i32, i32
  }
  func.func @transform_6(%arg0: i32) -> (i32, i32) {
    %c0_i32 = arith.constant 0 : i32
    %c0_i32_0 = arith.constant 0 : i32
    %c0_i32_1 = arith.constant 0 : i32
    return %c0_i32, %c0_i32_0 : i32, i32
  }
  func.func @transform_7(%arg0: i32) -> (i32, i32) {
    %c0_i32 = arith.constant 0 : i32
    %c0_i32_0 = arith.constant 0 : i32
    %c0_i32_1 = arith.constant 0 : i32
    return %c0_i32, %c0_i32_0 : i32, i32
  }
  func.func @transform_8(%arg0: i32) -> (i32, i32, i32) {
    %c0_i32 = arith.constant 0 : i32
    %c0_i32_0 = arith.constant 0 : i32
    %c0_i32_1 = arith.constant 0 : i32
    return %arg0, %c0_i32, %c0_i32_0 : i32, i32, i32
  }
}

</mosaic_0001>

<llo_original>
// kernel: gc_forward.1
$region0: #{gc_forward.1}
  #allocation0 [shape = 'u32[]', space=smem, size = 0x4, offset = 0x4, fixed_abs, tag = 'smem constant byte address 0x4 - core index']
  #allocation1 [shape = 'u32[144,128]{1,0:T(1,128)}', space=vmem, size = 0x12000, scoped, tag = 'internal scratch']
  %s0 = inlined_call_operand.vmem [shape: f32[2,64,256], index: 0, kind: input, shape index: {}]
  %s1 = inlined_call_operand.vmem [shape: f32[1,64], index: 1, kind: input, shape index: {}]
  %s2 = inlined_call_operand.vmem [shape: f32[64,32], index: 2, kind: input, shape index: {}]
  %s3 = inlined_call_operand.vmem [shape: f32[1,32], index: 3, kind: input, shape index: {}]
  %s4 = inlined_call_operand.vmem [shape: f32[1,32], index: 4, kind: input, shape index: {}]
  %s5 = inlined_call_operand.vmem [shape: f32[1,32], index: 5, kind: input, shape index: {}]
  %s6 = inlined_call_operand.vmem [shape: f32[32,64], index: 6, kind: input, shape index: {}]
  %s7 = inlined_call_operand.vmem [shape: f32[1,64], index: 7, kind: input, shape index: {}]
  %s8 = inlined_call_operand.vmem [shape: f32[2,64,256], index: 8, kind: output, shape index: {}]
  %s9 = sld [smem:[#allocation0]]
  $region42: #{gc_forward.1} parent=0
    _
  %s11 = ssub.s32 1, %s9
  %s12 = scalar_select 0, %s11, %s9
  // Predicated region
  $region2: #{gc_forward.1} parent=0 // pred_check
    _
  $region3: #{gc_forward.1} parent=0 // pred_check_branch
    %14 = sbr.rel (0) target = $region5
  $region4: #{gc_forward.1} parent=0 // pred_region
    _
  $region5: #{gc_forward.1} parent=0 // pred_fallthru
    _
  // Predicated region
  $region6: #{gc_forward.1} parent=0 // pred_check
    _
  $region7: #{gc_forward.1} parent=0 // pred_check_branch
    %16 = sbr.rel (0) target = $region9
  $region8: #{gc_forward.1} parent=0 // pred_region
    _
  $region9: #{gc_forward.1} parent=0 // pred_fallthru
    _
  // Predicated region
  $region10: #{gc_forward.1} parent=0 // pred_check
    _
  $region11: #{gc_forward.1} parent=0 // pred_check_branch
    %18 = sbr.rel (0) target = $region13
  $region12: #{gc_forward.1} parent=0 // pred_region
    _
  $region13: #{gc_forward.1} parent=0 // pred_fallthru
    _
  // Predicated region
  $region14: #{gc_forward.1} parent=0 // pred_check
    _
  $region15: #{gc_forward.1} parent=0 // pred_check_branch
    %20 = sbr.rel (0) target = $region17
  $region16: #{gc_forward.1} parent=0 // pred_region
    _
  $region17: #{gc_forward.1} parent=0 // pred_fallthru
    _
  // Predicated region
  $region18: #{gc_forward.1} parent=0 // pred_check
    _
  $region19: #{gc_forward.1} parent=0 // pred_check_branch
    %22 = sbr.rel (0) target = $region21
  $region20: #{gc_forward.1} parent=0 // pred_region
    _
  $region21: #{gc_forward.1} parent=0 // pred_fallthru
    _
  // Predicated region
  $region22: #{gc_forward.1} parent=0 // pred_check
    _
  $region23: #{gc_forward.1} parent=0 // pred_check_branch
    %24 = sbr.rel (0) target = $region25
  $region24: #{gc_forward.1} parent=0 // pred_region
    _
  $region25: #{gc_forward.1} parent=0 // pred_fallthru
    _
  // Predicated region
  $region26: #{gc_forward.1} parent=0 // pred_check
    _
  $region27: #{gc_forward.1} parent=0 // pred_check_branch
    %26 = sbr.rel (0) target = $region29
  $region28: #{gc_forward.1} parent=0 // pred_region
    _
  $region29: #{gc_forward.1} parent=0 // pred_fallthru
    _
  // Predicated region
  $region30: #{gc_forward.1} parent=0 // pred_check
    _
  $region31: #{gc_forward.1} parent=0 // pred_check_branch
    %28 = sbr.rel (0) target = $region33
  $region32: #{gc_forward.1} parent=0 // pred_region
    _
  $region33: #{gc_forward.1} parent=0 // pred_fallthru
    _
  %v29 = vld [vmem:[%s1] sm:$0x1]
  %v30 = vld [vmem:[%s0] sm:$0xff]
  %v31 = vld [vmem:[%s0 + $0x8] sm:$0xff]
  %v32 = vld [vmem:[%s0 + $0x10] sm:$0xff]
  %v33 = vld [vmem:[%s0 + $0x18] sm:$0xff]
  %v34 = vld [vmem:[%s0 + $0x20] sm:$0xff]
  %v35 = vld [vmem:[%s0 + $0x28] sm:$0xff]
  %v36 = vld [vmem:[%s0 + $0x30] sm:$0xff]
  %v37 = vld [vmem:[%s0 + $0x38] sm:$0xff]
  %v38 = vld [vmem:[%s0 + $0x40] sm:$0xff]
  %v39 = vld [vmem:[%s0 + $0x48] sm:$0xff]
  %v40 = vld [vmem:[%s0 + $0x50] sm:$0xff]
  %v41 = vld [vmem:[%s0 + $0x58] sm:$0xff]
  %v42 = vld [vmem:[%s0 + $0x60] sm:$0xff]
  %v43 = vld [vmem:[%s0 + $0x68] sm:$0xff]
  %v44 = vld [vmem:[%s0 + $0x70] sm:$0xff]
  %v45 = vld [vmem:[%s0 + $0x78] sm:$0xff]
  %v46 = vld [vmem:[%s0 + $0x80] sm:$0xff]
  %v47 = vld [vmem:[%s0 + $0x88] sm:$0xff]
  %v48 = vld [vmem:[%s0 + $0x90] sm:$0xff]
  %v49 = vld [vmem:[%s0 + $0x98] sm:$0xff]
  %v50 = vld [vmem:[%s0 + $0xa0] sm:$0xff]
  %v51 = vld [vmem:[%s0 + $0xa8] sm:$0xff]
  %v52 = vld [vmem:[%s0 + $0xb0] sm:$0xff]
  %v53 = vld [vmem:[%s0 + $0xb8] sm:$0xff]
  %v54 = vld [vmem:[%s0 + $0xc0] sm:$0xff]
  %v55 = vld [vmem:[%s0 + $0xc8] sm:$0xff]
  %v56 = vld [vmem:[%s0 + $0xd0] sm:$0xff]
  %v57 = vld [vmem:[%s0 + $0xd8] sm:$0xff]
  %v58 = vld [vmem:[%s0 + $0xe0] sm:$0xff]
  %v59 = vld [vmem:[%s0 + $0xe8] sm:$0xff]
  %v60 = vld [vmem:[%s0 + $0xf0] sm:$0xff]
  %v61 = vld [vmem:[%s0 + $0xf8] sm:$0xff]
  %vm62 = vcmask 523264
  %v64 = vsel %vm62, %v29, 0
  %66 = vmatprep.subr.mxu0 %v31
  %67 = vmatpush1.msra.mxu0 %v30
  %68 = vmatprep.subr.mxu0 %v33
  %69 = vmatpush1.msra.mxu0 %v32
  %70 = vmatprep.subr.mxu0 %v35
  %71 = vmatpush1.msra.mxu0 %v34
  %72 = vmatprep.subr.mxu0 %v37
  %73 = vmatpush1.msra.mxu0 %v36
  %74 = vmatprep.subr.mxu0 %v39
  %75 = vmatpush1.msra.mxu0 %v38
  %76 = vmatprep.subr.mxu0 %v41
  %77 = vmatpush1.msra.mxu0 %v40
  %78 = vmatprep.subr.mxu0 %v43
  %79 = vmatpush1.msra.mxu0 %v42
  %80 = vmatprep.subr.mxu0 %v45
  %81 = vmatpush1.msra.mxu0 %v44
  %82 = vmatprep.subr.mxu0 0.0
  %83 = vmatpush1.msra.mxu0 0.0
  %84 = vmatprep.subr.mxu0 0.0
  %85 = vmatpush1.msra.mxu0 0.0
  %86 = vmatprep.subr.mxu0 0.0
  %87 = vmatpush1.msra.mxu0 0.0
  %88 = vmatprep.subr.mxu0 0.0
  %89 = vmatpush1.msra.mxu0 0.0
  %90 = vmatprep.subr.mxu0 0.0
  %91 = vmatpush1.msra.mxu0 0.0
  %92 = vmatprep.subr.mxu0 0.0
  %93 = vmatpush1.msra.mxu0 0.0
  %94 = vmatprep.subr.mxu0 0.0
  %95 = vmatpush1.msra.mxu0 0.0
  %96 = vmatprep.subr.mxu0 0.0
  %97 = vmatpush1.msra.mxu0 0.0
  %98 = vmatprep.subr.mxu0 0.0
  %99 = vmatpush1.msra.mxu0 0.0
  %100 = vmatprep.subr.mxu0 0.0
  %101 = vmatpush1.msra.mxu0 0.0
  %102 = vmatprep.subr.mxu0 0.0
  %103 = vmatpush1.msra.mxu0 0.0
  %104 = vmatprep.subr.mxu0 0.0
  %105 = vmatpush1.msra.mxu0 0.0
  %106 = vmatprep.subr.mxu0 0.0
  %107 = vmatpush1.msra.mxu0 0.0
  %108 = vmatprep.subr.mxu0 0.0
  %109 = vmatpush1.msra.mxu0 0.0
  %110 = vmatprep.subr.mxu0 0.0
  %111 = vmatpush1.msra.mxu0 0.0
  %112 = vmatprep.subr.mxu0 0.0
  %113 = vmatpush1.msra.mxu0 0.0
  %114 = vmatprep.subr.mxu0 0.0
  %115 = vmatpush1.msra.mxu0 0.0
  %116 = vmatprep.subr.mxu0 0.0
  %117 = vmatpush1.msra.mxu0 0.0
  %118 = vmatprep.subr.mxu0 0.0
  %119 = vmatpush1.msra.mxu0 0.0
  %120 = vmatprep.subr.mxu0 0.0
  %121 = vmatpush1.msra.mxu0 0.0
  %122 = vmatprep.subr.mxu0 0.0
  %123 = vmatpush1.msra.mxu0 0.0
  %124 = vmatprep.subr.mxu0 0.0
  %125 = vmatpush1.msra.mxu0 0.0
  %126 = vmatprep.subr.mxu0 0.0
  %127 = vmatpush1.msra.mxu0 0.0
  %128 = vmatprep.subr.mxu0 0.0
  %129 = vmatpush1.msra.mxu0 0.0
  %130 = vmatprep.mubr.f32.mxu0 0.0
  %131 = vmatmul.mubr.f32.gmra.mrb[0].mxu0 %v64
  %v132 = vpop.f32.mrb[0].mxu0
  %v133 = vadd.f32 0.0, %v132
  %v134 = vpop.f32.mrb[0].mxu0
  %v135 = vadd.f32 0.0, %v134
  %136 = vdwg.mxu0
  %137 = vmatprep.subr.mxu0 %v47
  %138 = vmatpush1.msra.mxu0 %v46
  %139 = vmatprep.subr.mxu0 %v49
  %140 = vmatpush1.msra.mxu0 %v48
  %141 = vmatprep.subr.mxu0 %v51
  %142 = vmatpush1.msra.mxu0 %v50
  %143 = vmatprep.subr.mxu0 %v53
  %144 = vmatpush1.msra.mxu0 %v52
  %145 = vmatprep.subr.mxu0 %v55
  %146 = vmatpush1.msra.mxu0 %v54
  %147 = vmatprep.subr.mxu0 %v57
  %148 = vmatpush1.msra.mxu0 %v56
  %149 = vmatprep.subr.mxu0 %v59
  %150 = vmatpush1.msra.mxu0 %v58
  %151 = vmatprep.subr.mxu0 %v61
  %152 = vmatpush1.msra.mxu0 %v60
  %153 = vmatprep.subr.mxu0 0.0
  %154 = vmatpush1.msra.mxu0 0.0
  %155 = vmatprep.subr.mxu0 0.0
  %156 = vmatpush1.msra.mxu0 0.0
  %157 = vmatprep.subr.mxu0 0.0
  %158 = vmatpush1.msra.mxu0 0.0
  %159 = vmatprep.subr.mxu0 0.0
  %160 = vmatpush1.msra.mxu0 0.0
  %161 = vmatprep.subr.mxu0 0.0
  %162 = vmatpush1.msra.mxu0 0.0
  %163 = vmatprep.subr.mxu0 0.0
  %164 = vmatpush1.msra.mxu0 0.0
  %165 = vmatprep.subr.mxu0 0.0
  %166 = vmatpush1.msra.mxu0 0.0
  %167 = vmatprep.subr.mxu0 0.0
  %168 = vmatpush1.msra.mxu0 0.0
  %169 = vmatprep.subr.mxu0 0.0
  %170 = vmatpush1.msra.mxu0 0.0
  %171 = vmatprep.subr.mxu0 0.0
  %172 = vmatpush1.msra.mxu0 0.0
  %173 = vmatprep.subr.mxu0 0.0
  %174 = vmatpush1.msra.mxu0 0.0
  %175 = vmatprep.subr.mxu0 0.0
  %176 = vmatpush1.msra.mxu0 0.0
  %177 = vmatprep.subr.mxu0 0.0
  %178 = vmatpush1.msra.mxu0 0.0
  %179 = vmatprep.subr.mxu0 0.0
  %180 = vmatpush1.msra.mxu0 0.0
  %181 = vmatprep.subr.mxu0 0.0
  %182 = vmatpush1.msra.mxu0 0.0
  %183 = vmatprep.subr.mxu0 0.0
  %184 = vmatpush1.msra.mxu0 0.0
  %185 = vmatprep.subr.mxu0 0.0
  %186 = vmatpush1.msra.mxu0 0.0
  %187 = vmatprep.subr.mxu0 0.0
  %188 = vmatpush1.msra.mxu0 0.0
  %189 = vmatprep.subr.mxu0 0.0
  %190 = vmatpush1.msra.mxu0 0.0
  %191 = vmatprep.subr.mxu0 0.0
  %192 = vmatpush1.msra.mxu0 0.0
  %193 = vmatprep.subr.mxu0 0.0
  %194 = vmatpush1.msra.mxu0 0.0
  %195 = vmatprep.subr.mxu0 0.0
  %196 = vmatpush1.msra.mxu0 0.0
  %197 = vmatprep.subr.mxu0 0.0
  %198 = vmatpush1.msra.mxu0 0.0
  %199 = vmatprep.subr.mxu0 0.0
  %200 = vmatpush1.msra.mxu0 0.0
  %201 = vmatprep.mubr.f32.mxu0 0.0
  %202 = vmatmul.mubr.f32.gmra.mrb[0].mxu0 %v64
  %v203 = vpop.f32.mrb[0].mxu0
  %v204 = vadd.f32 0.0, %v203
  %v205 = vpop.f32.mrb[0].mxu0
  %v206 = vadd.f32 0.0, %v205
  %207 = vdwg.mxu0
  %vm208 = vcmask 1040384
  %v209 = vsel %vm208, %v133, -inf
  %v210 = vsel %vm208, %v135, -inf
  %v211 = vmax.f32 %v209, %v210
  %212 = vmax.xlane.f32.xlu0 %v211
  %v213 = vpop.xlane.xlu0 %212
  %v214 = vsel %vm208, %v204, -inf
  %v215 = vsel %vm208, %v206, -inf
  %v216 = vmax.f32 %v214, %v215
  %217 = vmax.xlane.f32.xlu0 %v216
  %v218 = vpop.xlane.xlu0 %217
  %v219 = vsub.f32 %v133, %v213
  %v220 = vsub.f32 %v135, %v213
  %v221 = vsub.f32 %v204, %v218
  %v222 = vsub.f32 %v206, %v218
  %v223 = vmul.f32 %v219, 1.442695
  %v224 = vpow.pop %v223
  %v225 = vmul.f32 %v220, 1.442695
  %v226 = vpow.pop %v225
  %v227 = vmul.f32 %v221, 1.442695
  %v228 = vpow.pop %v227
  %v229 = vmul.f32 %v222, 1.442695
  %v230 = vpow.pop %v229
  %v231 = vsel %vm208, %v224, 0.0
  %v232 = vsel %vm208, %v226, 0.0
  %v233 = vadd.f32 %v231, %v232
  %234 = vadd.xlane.f32.xlu0 %v233
  %v235 = vpop.xlane.xlu0 %234
  %v236 = vsel %vm208, %v228, 0.0
  %v237 = vsel %vm208, %v230, 0.0
  %v238 = vadd.f32 %v236, %v237
  %239 = vadd.xlane.f32.xlu0 %v238
  %v240 = vpop.xlane.xlu0 %239
  %v241 = vrcp.pop %v235
  %v242 = vmul.f32 %v224, %v241
  %v243 = vmul.f32 %v226, %v241
  %v244 = vrcp.pop %v240
  %v245 = vmul.f32 %v228, %v244
  %v246 = vmul.f32 %v230, %v244
  %v247 = vld [vmem:[%s0] sm:$0xff]
  %v248 = vld [vmem:[%s0 + $0x8] sm:$0xff]
  %v249 = vld [vmem:[%s0 + $0x10] sm:$0xff]
  %v250 = vld [vmem:[%s0 + $0x18] sm:$0xff]
  %v251 = vld [vmem:[%s0 + $0x20] sm:$0xff]
  %v252 = vld [vmem:[%s0 + $0x28] sm:$0xff]
  %v253 = vld [vmem:[%s0 + $0x30] sm:$0xff]
  %v254 = vld [vmem:[%s0 + $0x38] sm:$0xff]
  %v255 = vld [vmem:[%s0 + $0x40] sm:$0xff]
  %v256 = vld [vmem:[%s0 + $0x48] sm:$0xff]
  %v257 = vld [vmem:[%s0 + $0x50] sm:$0xff]
  %v258 = vld [vmem:[%s0 + $0x58] sm:$0xff]
  %v259 = vld [vmem:[%s0 + $0x60] sm:$0xff]
  %v260 = vld [vmem:[%s0 + $0x68] sm:$0xff]
  %v261 = vld [vmem:[%s0 + $0x70] sm:$0xff]
  %v262 = vld [vmem:[%s0 + $0x78] sm:$0xff]
  %v263 = vld [vmem:[%s0 + $0x80] sm:$0xff]
  %v264 = vld [vmem:[%s0 + $0x88] sm:$0xff]
  %v265 = vld [vmem:[%s0 + $0x90] sm:$0xff]
  %v266 = vld [vmem:[%s0 + $0x98] sm:$0xff]
  %v267 = vld [vmem:[%s0 + $0xa0] sm:$0xff]
  %v268 = vld [vmem:[%s0 + $0xa8] sm:$0xff]
  %v269 = vld [vmem:[%s0 + $0xb0] sm:$0xff]
  %v270 = vld [vmem:[%s0 + $0xb8] sm:$0xff]
  %v271 = vld [vmem:[%s0 + $0xc0] sm:$0xff]
  %v272 = vld [vmem:[%s0 + $0xc8] sm:$0xff]
  %v273 = vld [vmem:[%s0 + $0xd0] sm:$0xff]
  %v274 = vld [vmem:[%s0 + $0xd8] sm:$0xff]
  %v275 = vld [vmem:[%s0 + $0xe0] sm:$0xff]
  %v276 = vld [vmem:[%s0 + $0xe8] sm:$0xff]
  %v277 = vld [vmem:[%s0 + $0xf0] sm:$0xff]
  %v278 = vld [vmem:[%s0 + $0xf8] sm:$0xff]
  %v279 = vlaneseq
  %v280 = vshrl.u32 %v279, 7
  %v281 = vsub.s32 0, %v280
  %v282 = vrot.slane %v242, %v281
  %v283 = vlaneseq
  %v284 = vshrl.u32 %v283, 7
  %v285 = vsub.s32 0, %v284
  %v286 = vrot.slane %v243, %v285
  %v287 = vmul.f32 %v247, %v282
  %v288 = vmul.f32 %v248, %v286
  %v289 = vmul.f32 %v249, %v282
  %v290 = vmul.f32 %v250, %v286
  %v291 = vmul.f32 %v251, %v282
  %v292 = vmul.f32 %v252, %v286
  %v293 = vmul.f32 %v253, %v282
  %v294 = vmul.f32 %v254, %v286
  %v295 = vmul.f32 %v255, %v282
  %v296 = vmul.f32 %v256, %v286
  %v297 = vmul.f32 %v257, %v282
  %v298 = vmul.f32 %v258, %v286
  %v299 = vmul.f32 %v259, %v282
  %v300 = vmul.f32 %v260, %v286
  %v301 = vmul.f32 %v261, %v282
  %v302 = vmul.f32 %v262, %v286
  %v303 = vadd.f32 %v287, %v288
  %304 = vadd.xlane.f32.xlu0 %v303
  %v305 = vpop.xlane.xlu0 %304
  %v306 = vadd.f32 %v289, %v290
  %307 = vadd.xlane.f32.xlu0 %v306
  %v308 = vpop.xlane.xlu0 %307
  %v309 = vadd.f32 %v291, %v292
  %310 = vadd.xlane.f32.xlu0 %v309
  %v311 = vpop.xlane.xlu0 %310
  %v312 = vadd.f32 %v293, %v294
  %313 = vadd.xlane.f32.xlu0 %v312
  %v314 = vpop.xlane.xlu0 %313
  %v315 = vadd.f32 %v295, %v296
  %316 = vadd.xlane.f32.xlu0 %v315
  %v317 = vpop.xlane.xlu0 %316
  %v318 = vadd.f32 %v297, %v298
  %319 = vadd.xlane.f32.xlu0 %v318
  %v320 = vpop.xlane.xlu0 %319
  %v321 = vadd.f32 %v299, %v300
  %322 = vadd.xlane.f32.xlu0 %v321
  %v323 = vpop.xlane.xlu0 %322
  %v324 = vadd.f32 %v301, %v302
  %325 = vadd.xlane.f32.xlu0 %v324
  %v326 = vpop.xlane.xlu0 %325
  %v327 = vlaneseq
  %v328 = vshrl.u32 %v327, 7
  %v329 = vsub.s32 0, %v328
  %v330 = vrot.slane %v245, %v329
  %v331 = vlaneseq
  %v332 = vshrl.u32 %v331, 7
  %v333 = vsub.s32 0, %v332
  %v334 = vrot.slane %v246, %v333
  %v335 = vmul.f32 %v263, %v330
  %v336 = vmul.f32 %v264, %v334
  %v337 = vmul.f32 %v265, %v330
  %v338 = vmul.f32 %v266, %v334
  %v339 = vmul.f32 %v267, %v330
  %v340 = vmul.f32 %v268, %v334
  %v341 = vmul.f32 %v269, %v330
  %v342 = vmul.f32 %v270, %v334
  %v343 = vmul.f32 %v271, %v330
  %v344 = vmul.f32 %v272, %v334
  %v345 = vmul.f32 %v273, %v330
  %v346 = vmul.f32 %v274, %v334
  %v347 = vmul.f32 %v275, %v330
  %v348 = vmul.f32 %v276, %v334
  %v349 = vmul.f32 %v277, %v330
  %v350 = vmul.f32 %v278, %v334
  %v351 = vadd.f32 %v335, %v336
  %352 = vadd.xlane.f32.xlu0 %v351
  %v353 = vpop.xlane.xlu0 %352
  %v354 = vadd.f32 %v337, %v338
  %355 = vadd.xlane.f32.xlu0 %v354
  %v356 = vpop.xlane.xlu0 %355
  %v357 = vadd.f32 %v339, %v340
  %358 = vadd.xlane.f32.xlu0 %v357
  %v359 = vpop.xlane.xlu0 %358
  %v360 = vadd.f32 %v341, %v342
  %361 = vadd.xlane.f32.xlu0 %v360
  %v362 = vpop.xlane.xlu0 %361
  %v363 = vadd.f32 %v343, %v344
  %364 = vadd.xlane.f32.xlu0 %v363
  %v365 = vpop.xlane.xlu0 %364
  %v366 = vadd.f32 %v345, %v346
  %367 = vadd.xlane.f32.xlu0 %v366
  %v368 = vpop.xlane.xlu0 %367
  %v369 = vadd.f32 %v347, %v348
  %370 = vadd.xlane.f32.xlu0 %v369
  %v371 = vpop.xlane.xlu0 %370
  %v372 = vadd.f32 %v349, %v350
  %373 = vadd.xlane.f32.xlu0 %v372
  %v374 = vpop.xlane.xlu0 %373
  %v375 = vld [vmem:[%s2] sm:$0xff]
  %v376 = vld [vmem:[%s2 + $0x8] sm:$0xff]
  %v377 = vld [vmem:[%s2 + $0x10] sm:$0xff]
  %v378 = vld [vmem:[%s2 + $0x18] sm:$0xff]
  %v379 = vld [vmem:[%s2 + $0x20] sm:$0xff]
  %v380 = vld [vmem:[%s2 + $0x28] sm:$0xff]
  %v381 = vld [vmem:[%s2 + $0x30] sm:$0xff]
  %v382 = vld [vmem:[%s2 + $0x38] sm:$0xff]
  %v383 = vld [vmem:[%s3] sm:$0x1]
  %v385 = vlaneseq
  %v386 = vshrl.u32 %v385, 7
  %v387 = vsub.s32 0, %v386
  %v388 = vrot.slane %v383, %v387
  %406 = vset.pattern.permute.xlu0 0
  %407 = vperm.xlu0 %406, %v305
  %v408 = vpop.permute.xlu0 %407
  %409 = vset.pattern.permute.xlu0 0
  %410 = vperm.xlu0 %409, %v308
  %v411 = vpop.permute.xlu0 %410
  %412 = vset.pattern.permute.xlu0 0
  %413 = vperm.xlu0 %412, %v311
  %v414 = vpop.permute.xlu0 %413
  %415 = vset.pattern.permute.xlu0 0
  %416 = vperm.xlu0 %415, %v314
  %v417 = vpop.permute.xlu0 %416
  %418 = vset.pattern.permute.xlu0 0
  %419 = vperm.xlu0 %418, %v317
  %v420 = vpop.permute.xlu0 %419
  %421 = vset.pattern.permute.xlu0 0
  %422 = vperm.xlu0 %421, %v320
  %v423 = vpop.permute.xlu0 %422
  %424 = vset.pattern.permute.xlu0 0
  %425 = vperm.xlu0 %424, %v323
  %v426 = vpop.permute.xlu0 %425
  %427 = vset.pattern.permute.xlu0 0
  %428 = vperm.xlu0 %427, %v326
  %v429 = vpop.permute.xlu0 %428
  %430 = vset.pattern.permute.xlu0 0
  %431 = vperm.xlu0 %430, %v353
  %v432 = vpop.permute.xlu0 %431
  %433 = vset.pattern.permute.xlu0 0
  %434 = vperm.xlu0 %433, %v356
  %v435 = vpop.permute.xlu0 %434
  %436 = vset.pattern.permute.xlu0 0
  %437 = vperm.xlu0 %436, %v359
  %v438 = vpop.permute.xlu0 %437
  %439 = vset.pattern.permute.xlu0 0
  %440 = vperm.xlu0 %439, %v362
  %v441 = vpop.permute.xlu0 %440
  %442 = vset.pattern.permute.xlu0 0
  %443 = vperm.xlu0 %442, %v365
  %v444 = vpop.permute.xlu0 %443
  %445 = vset.pattern.permute.xlu0 0
  %446 = vperm.xlu0 %445, %v368
  %v447 = vpop.permute.xlu0 %446
  %448 = vset.pattern.permute.xlu0 0
  %449 = vperm.xlu0 %448, %v371
  %v450 = vpop.permute.xlu0 %449
  %451 = vset.pattern.permute.xlu0 0
  %452 = vperm.xlu0 %451, %v374
  %v453 = vpop.permute.xlu0 %452
  %v454 = vlaneseq
  %v455 = vand.u32 %v454, 127
  %v456 = vlaneseq
  %v457 = vshrl.u32 %v456, 7
  %v458 = vsub.s32 %v455, %v457
  %v459 = vrot.slane %v408, %v458
  %v460 = vadd.s32 %v455, 4294967288
  %v461 = vlaneseq
  %v462 = vshrl.u32 %v461, 7
  %v463 = vsub.s32 %v460, %v462
  %v464 = vrot.slane %v411, %v463
  %vm465 = vcmask 130112
  %v466 = vsel %vm465, %v464, %v459
  %v467 = vadd.s32 %v455, 4294967280
  %v468 = vlaneseq
  %v469 = vshrl.u32 %v468, 7
  %v470 = vsub.s32 %v467, %v469
  %v471 = vrot.slane %v414, %v470
  %vm472 = vcmask 195712
  %v473 = vsel %vm472, %v471, %v466
  %v474 = vadd.s32 %v455, 4294967272
  %v475 = vlaneseq
  %v476 = vshrl.u32 %v475, 7
  %v477 = vsub.s32 %v474, %v476
  %v478 = vrot.slane %v417, %v477
  %vm479 = vcmask 261312
  %v480 = vsel %vm479, %v478, %v473
  %v481 = vadd.s32 %v455, 4294967264
  %v482 = vlaneseq
  %v483 = vshrl.u32 %v482, 7
  %v484 = vsub.s32 %v481, %v483
  %v485 = vrot.slane %v420, %v484
  %vm486 = vcmask 326912
  %v487 = vsel %vm486, %v485, %v480
  %v488 = vadd.s32 %v455, 4294967256
  %v489 = vlaneseq
  %v490 = vshrl.u32 %v489, 7
  %v491 = vsub.s32 %v488, %v490
  %v492 = vrot.slane %v423, %v491
  %vm493 = vcmask 392512
  %v494 = vsel %vm493, %v492, %v487
  %v495 = vadd.s32 %v455, 4294967248
  %v496 = vlaneseq
  %v497 = vshrl.u32 %v496, 7
  %v498 = vsub.s32 %v495, %v497
  %v499 = vrot.slane %v426, %v498
  %vm500 = vcmask 458112
  %v501 = vsel %vm500, %v499, %v494
  %v502 = vadd.s32 %v455, 4294967240
  %v503 = vlaneseq
  %v504 = vshrl.u32 %v503, 7
  %v505 = vsub.s32 %v502, %v504
  %v506 = vrot.slane %v429, %v505
  %vm507 = vcmask 523712
  %v508 = vsel %vm507, %v506, %v501
  %v509 = vlaneseq
  %v510 = vshrl.u32 %v509, 7
  %v511 = vsub.s32 %v455, %v510
  %v512 = vrot.slane %v432, %v511
  %v513 = vlaneseq
  %v514 = vshrl.u32 %v513, 7
  %v515 = vsub.s32 %v460, %v514
  %v516 = vrot.slane %v435, %v515
  %v517 = vsel %vm465, %v516, %v512
  %v518 = vlaneseq
  %v519 = vshrl.u32 %v518, 7
  %v520 = vsub.s32 %v467, %v519
  %v521 = vrot.slane %v438, %v520
  %v522 = vsel %vm472, %v521, %v517
  %v523 = vlaneseq
  %v524 = vshrl.u32 %v523, 7
  %v525 = vsub.s32 %v474, %v524
  %v526 = vrot.slane %v441, %v525
  %v527 = vsel %vm479, %v526, %v522
  %v528 = vlaneseq
  %v529 = vshrl.u32 %v528, 7
  %v530 = vsub.s32 %v481, %v529
  %v531 = vrot.slane %v444, %v530
  %v532 = vsel %vm486, %v531, %v527
  %v533 = vlaneseq
  %v534 = vshrl.u32 %v533, 7
  %v535 = vsub.s32 %v488, %v534
  %v536 = vrot.slane %v447, %v535
  %v537 = vsel %vm493, %v536, %v532
  %v538 = vlaneseq
  %v539 = vshrl.u32 %v538, 7
  %v540 = vsub.s32 %v495, %v539
  %v541 = vrot.slane %v450, %v540
  %v542 = vsel %vm500, %v541, %v537
  %v543 = vlaneseq
  %v544 = vshrl.u32 %v543, 7
  %v545 = vsub.s32 %v502, %v544
  %v546 = vrot.slane %v453, %v545
  %v547 = vsel %vm507, %v546, %v542
  %vm548 = vcmask 1041409
  %v549 = vsel %vm548, %v547, %v508
  %v550 = vsel %vm62, %v549, 0
  %552 = vmatprep.subr.mxu0 0.0
  %553 = vmatpush1.msra.mxu0 %v375
  %554 = vmatprep.subr.mxu0 0.0
  %555 = vmatpush1.msra.mxu0 %v376
  %556 = vmatprep.subr.mxu0 0.0
  %557 = vmatpush1.msra.mxu0 %v377
  %558 = vmatprep.subr.mxu0 0.0
  %559 = vmatpush1.msra.mxu0 %v378
  %560 = vmatprep.subr.mxu0 0.0
  %561 = vmatpush1.msra.mxu0 %v379
  %562 = vmatprep.subr.mxu0 0.0
  %563 = vmatpush1.msra.mxu0 %v380
  %564 = vmatprep.subr.mxu0 0.0
  %565 = vmatpush1.msra.mxu0 %v381
  %566 = vmatprep.subr.mxu0 0.0
  %567 = vmatpush1.msra.mxu0 %v382
  %568 = vmatprep.subr.mxu0 0.0
  %569 = vmatpush1.msra.mxu0 0.0
  %570 = vmatprep.subr.mxu0 0.0
  %571 = vmatpush1.msra.mxu0 0.0
  %572 = vmatprep.subr.mxu0 0.0
  %573 = vmatpush1.msra.mxu0 0.0
  %574 = vmatprep.subr.mxu0 0.0
  %575 = vmatpush1.msra.mxu0 0.0
  %576 = vmatprep.subr.mxu0 0.0
  %577 = vmatpush1.msra.mxu0 0.0
  %578 = vmatprep.subr.mxu0 0.0
  %579 = vmatpush1.msra.mxu0 0.0
  %580 = vmatprep.subr.mxu0 0.0
  %581 = vmatpush1.msra.mxu0 0.0
  %582 = vmatprep.subr.mxu0 0.0
  %583 = vmatpush1.msra.mxu0 0.0
  %584 = vmatprep.subr.mxu0 0.0
  %585 = vmatpush1.msra.mxu0 0.0
  %586 = vmatprep.subr.mxu0 0.0
  %587 = vmatpush1.msra.mxu0 0.0
  %588 = vmatprep.subr.mxu0 0.0
  %589 = vmatpush1.msra.mxu0 0.0
  %590 = vmatprep.subr.mxu0 0.0
  %591 = vmatpush1.msra.mxu0 0.0
  %592 = vmatprep.subr.mxu0 0.0
  %593 = vmatpush1.msra.mxu0 0.0
  %594 = vmatprep.subr.mxu0 0.0
  %595 = vmatpush1.msra.mxu0 0.0
  %596 = vmatprep.subr.mxu0 0.0
  %597 = vmatpush1.msra.mxu0 0.0
  %598 = vmatprep.subr.mxu0 0.0
  %599 = vmatpush1.msra.mxu0 0.0
  %600 = vmatprep.subr.mxu0 0.0
  %601 = vmatpush1.msra.mxu0 0.0
  %602 = vmatprep.subr.mxu0 0.0
  %603 = vmatpush1.msra.mxu0 0.0
  %604 = vmatprep.subr.mxu0 0.0
  %605 = vmatpush1.msra.mxu0 0.0
  %606 = vmatprep.subr.mxu0 0.0
  %607 = vmatpush1.msra.mxu0 0.0
  %608 = vmatprep.subr.mxu0 0.0
  %609 = vmatpush1.msra.mxu0 0.0
  %610 = vmatprep.subr.mxu0 0.0
  %611 = vmatpush1.msra.mxu0 0.0
  %612 = vmatprep.subr.mxu0 0.0
  %613 = vmatpush1.msra.mxu0 0.0
  %614 = vmatprep.subr.mxu0 0.0
  %615 = vmatpush1.msra.mxu0 0.0
  %616 = vmatprep.mubr.f32.mxu0 0.0
  %617 = vmatmul.mubr.f32.gmra.mrb[0].mxu0 %v550
  %v618 = vpop.f32.mrb[0].mxu0
  %v619 = vadd.f32 %v388, %v618
  %v620 = vpop.f32.mrb[0].mxu0
  %621 = vdwg.mxu0
  %vm622 = vcmask 254976
  %v623 = vsel %vm622, %v619, 0.0
  %624 = vadd.xlane.f32.xlu0 %v623
  %v625 = vpop.xlane.xlu0 %624
  %v626 = vrcp.pop 32.0
  %v627 = vmul.f32 %v625, %v626
  %v628 = vsub.f32 %v619, %v627
  %v629 = vmul.f32 %v628, %v628
  %v630 = vsel %vm622, %v629, 0.0
  %631 = vadd.xlane.f32.xlu0 %v630
  %v632 = vpop.xlane.xlu0 %631
  %v633 = vmul.f32 %v632, %v626
  %v634 = vadd.f32 %v633, 1e-05
  %v635 = vrsqrt.pop %v634
  %v636 = vmul.f32 %v628, %v635
  %v637 = vld [vmem:[%s4] sm:$0x1]
  %v639 = vlaneseq
  %v640 = vshrl.u32 %v639, 7
  %v641 = vsub.s32 0, %v640
  %v642 = vrot.slane %v637, %v641
  %v644 = vmul.f32 %v636, %v642
  %v645 = vld [vmem:[%s5] sm:$0x1]
  %v647 = vlaneseq
  %v648 = vshrl.u32 %v647, 7
  %v649 = vsub.s32 0, %v648
  %v650 = vrot.slane %v645, %v649
  %v652 = vadd.f32 %v644, %v650
  %v653 = vmax.f32 %v652, 0.0
  %v654 = vld [vmem:[%s6] sm:$0xff]
  %v655 = vld [vmem:[%s6 + $0x8] sm:$0xff]
  %v656 = vld [vmem:[%s6 + $0x10] sm:$0xff]
  %v657 = vld [vmem:[%s6 + $0x18] sm:$0xff]
  %v658 = vld [vmem:[%s7] sm:$0x1]
  %v660 = vlaneseq
  %v661 = vshrl.u32 %v660, 7
  %v662 = vsub.s32 0, %v661
  %v663 = vrot.slane %v658, %v662
  %vm665 = vcmask 261120
  %v667 = vsel %vm665, %v653, 0
  %669 = vmatprep.subr.mxu0 0.0
  %670 = vmatpush1.msra.mxu0 %v654
  %671 = vmatprep.subr.mxu0 0.0
  %672 = vmatpush1.msra.mxu0 %v655
  %673 = vmatprep.subr.mxu0 0.0
  %674 = vmatpush1.msra.mxu0 %v656
  %675 = vmatprep.subr.mxu0 0.0
  %676 = vmatpush1.msra.mxu0 %v657
  %677 = vmatprep.subr.mxu0 0.0
  %678 = vmatpush1.msra.mxu0 0.0
  %679 = vmatprep.subr.mxu0 0.0
  %680 = vmatpush1.msra.mxu0 0.0
  %681 = vmatprep.subr.mxu0 0.0
  %682 = vmatpush1.msra.mxu0 0.0
  %683 = vmatprep.subr.mxu0 0.0
  %684 = vmatpush1.msra.mxu0 0.0
  %685 = vmatprep.subr.mxu0 0.0
  %686 = vmatpush1.msra.mxu0 0.0
  %687 = vmatprep.subr.mxu0 0.0
  %688 = vmatpush1.msra.mxu0 0.0
  %689 = vmatprep.subr.mxu0 0.0
  %690 = vmatpush1.msra.mxu0 0.0
  %691 = vmatprep.subr.mxu0 0.0
  %692 = vmatpush1.msra.mxu0 0.0
  %693 = vmatprep.subr.mxu0 0.0
  %694 = vmatpush1.msra.mxu0 0.0
  %695 = vmatprep.subr.mxu0 0.0
  %696 = vmatpush1.msra.mxu0 0.0
  %697 = vmatprep.subr.mxu0 0.0
  %698 = vmatpush1.msra.mxu0 0.0
  %699 = vmatprep.subr.mxu0 0.0
  %700 = vmatpush1.msra.mxu0 0.0
  %701 = vmatprep.subr.mxu0 0.0
  %702 = vmatpush1.msra.mxu0 0.0
  %703 = vmatprep.subr.mxu0 0.0
  %704 = vmatpush1.msra.mxu0 0.0
  %705 = vmatprep.subr.mxu0 0.0
  %706 = vmatpush1.msra.mxu0 0.0
  %707 = vmatprep.subr.mxu0 0.0
  %708 = vmatpush1.msra.mxu0 0.0
  %709 = vmatprep.subr.mxu0 0.0
  %710 = vmatpush1.msra.mxu0 0.0
  %711 = vmatprep.subr.mxu0 0.0
  %712 = vmatpush1.msra.mxu0 0.0
  %713 = vmatprep.subr.mxu0 0.0
  %714 = vmatpush1.msra.mxu0 0.0
  %715 = vmatprep.subr.mxu0 0.0
  %716 = vmatpush1.msra.mxu0 0.0
  %717 = vmatprep.subr.mxu0 0.0
  %718 = vmatpush1.msra.mxu0 0.0
  %719 = vmatprep.subr.mxu0 0.0
  %720 = vmatpush1.msra.mxu0 0.0
  %721 = vmatprep.subr.mxu0 0.0
  %722 = vmatpush1.msra.mxu0 0.0
  %723 = vmatprep.subr.mxu0 0.0
  %724 = vmatpush1.msra.mxu0 0.0
  %725 = vmatprep.subr.mxu0 0.0
  %726 = vmatpush1.msra.mxu0 0.0
  %727 = vmatprep.subr.mxu0 0.0
  %728 = vmatpush1.msra.mxu0 0.0
  %729 = vmatprep.subr.mxu0 0.0
  %730 = vmatpush1.msra.mxu0 0.0
  %731 = vmatprep.subr.mxu0 0.0
  %732 = vmatpush1.msra.mxu0 0.0
  %733 = vmatprep.mubr.f32.mxu0 0.0
  %734 = vmatmul.mubr.f32.gmra.mrb[0].mxu0 %v667
  %v735 = vpop.f32.mrb[0].mxu0
  %v736 = vadd.f32 %v663, %v735
  %v737 = vpop.f32.mrb[0].mxu0
  %738 = vdwg.mxu0
  %v739 = vld [vmem:[%s0] sm:$0xff]
  %v740 = vld [vmem:[%s0 + $0x8] sm:$0xff]
  %v741 = vld [vmem:[%s0 + $0x10] sm:$0xff]
  %v742 = vld [vmem:[%s0 + $0x18] sm:$0xff]
  %v743 = vld [vmem:[%s0 + $0x20] sm:$0xff]
  %v744 = vld [vmem:[%s0 + $0x28] sm:$0xff]
  %v745 = vld [vmem:[%s0 + $0x30] sm:$0xff]
  %v746 = vld [vmem:[%s0 + $0x38] sm:$0xff]
  %v747 = vld [vmem:[%s0 + $0x40] sm:$0xff]
  %v748 = vld [vmem:[%s0 + $0x48] sm:$0xff]
  %v749 = vld [vmem:[%s0 + $0x50] sm:$0xff]
  %v750 = vld [vmem:[%s0 + $0x58] sm:$0xff]
  %v751 = vld [vmem:[%s0 + $0x60] sm:$0xff]
  %v752 = vld [vmem:[%s0 + $0x68] sm:$0xff]
  %v753 = vld [vmem:[%s0 + $0x70] sm:$0xff]
  %v754 = vld [vmem:[%s0 + $0x78] sm:$0xff]
  %v755 = vld [vmem:[%s0 + $0x80] sm:$0xff]
  %v756 = vld [vmem:[%s0 + $0x88] sm:$0xff]
  %v757 = vld [vmem:[%s0 + $0x90] sm:$0xff]
  %v758 = vld [vmem:[%s0 + $0x98] sm:$0xff]
  %v759 = vld [vmem:[%s0 + $0xa0] sm:$0xff]
  %v760 = vld [vmem:[%s0 + $0xa8] sm:$0xff]
  %v761 = vld [vmem:[%s0 + $0xb0] sm:$0xff]
  %v762 = vld [vmem:[%s0 + $0xb8] sm:$0xff]
  %v763 = vld [vmem:[%s0 + $0xc0] sm:$0xff]
  %v764 = vld [vmem:[%s0 + $0xc8] sm:$0xff]
  %v765 = vld [vmem:[%s0 + $0xd0] sm:$0xff]
  %v766 = vld [vmem:[%s0 + $0xd8] sm:$0xff]
  %v767 = vld [vmem:[%s0 + $0xe0] sm:$0xff]
  %v768 = vld [vmem:[%s0 + $0xe8] sm:$0xff]
  %v769 = vld [vmem:[%s0 + $0xf0] sm:$0xff]
  %v770 = vld [vmem:[%s0 + $0xf8] sm:$0xff]
  %v771 = vlaneseq
  %v772 = vshrl.u32 %v771, 7
  %v773 = vsub.s32 0, %v772
  %v774 = vrot.slane %v736, %v773
  %776 = vbcast.lane.b32.xlu0 %v774, 256
  %v777 = vpop.permute.xlu0 %776
  %s779 = sor.u32 256, 8
  %780 = vbcast.lane.b32.xlu0 %v774, %s779
  %v781 = vpop.permute.xlu0 %780
  %s783 = sor.u32 256, 16
  %784 = vbcast.lane.b32.xlu0 %v774, %s783
  %v785 = vpop.permute.xlu0 %784
  %s787 = sor.u32 256, 24
  %788 = vbcast.lane.b32.xlu0 %v774, %s787
  %v789 = vpop.permute.xlu0 %788
  %s791 = sor.u32 256, 32
  %792 = vbcast.lane.b32.xlu0 %v774, %s791
  %v793 = vpop.permute.xlu0 %792
  %s795 = sor.u32 256, 40
  %796 = vbcast.lane.b32.xlu0 %v774, %s795
  %v797 = vpop.permute.xlu0 %796
  %s799 = sor.u32 256, 48
  %800 = vbcast.lane.b32.xlu0 %v774, %s799
  %v801 = vpop.permute.xlu0 %800
  %s803 = sor.u32 256, 56
  %804 = vbcast.lane.b32.xlu0 %v774, %s803
  %v805 = vpop.permute.xlu0 %804
  %v806 = vlaneseq
  %v807 = vshrl.u32 %v806, 7
  %v808 = vsub.s32 1, %v807
  %v809 = vrot.slane %v736, %v808
  %811 = vbcast.lane.b32.xlu0 %v809, 256
  %v812 = vpop.permute.xlu0 %811
  %s814 = sor.u32 256, 8
  %815 = vbcast.lane.b32.xlu0 %v809, %s814
  %v816 = vpop.permute.xlu0 %815
  %s818 = sor.u32 256, 16
  %819 = vbcast.lane.b32.xlu0 %v809, %s818
  %v820 = vpop.permute.xlu0 %819
  %s822 = sor.u32 256, 24
  %823 = vbcast.lane.b32.xlu0 %v809, %s822
  %v824 = vpop.permute.xlu0 %823
  %s826 = sor.u32 256, 32
  %827 = vbcast.lane.b32.xlu0 %v809, %s826
  %v828 = vpop.permute.xlu0 %827
  %s830 = sor.u32 256, 40
  %831 = vbcast.lane.b32.xlu0 %v809, %s830
  %v832 = vpop.permute.xlu0 %831
  %s834 = sor.u32 256, 48
  %835 = vbcast.lane.b32.xlu0 %v809, %s834
  %v836 = vpop.permute.xlu0 %835
  %s838 = sor.u32 256, 56
  %839 = vbcast.lane.b32.xlu0 %v809, %s838
  %v840 = vpop.permute.xlu0 %839
  %v841 = vadd.f32 %v739, %v777
  %v842 = vadd.f32 %v740, %v777
  %v843 = vadd.f32 %v741, %v781
  %v844 = vadd.f32 %v742, %v781
  %v845 = vadd.f32 %v743, %v785
  %v846 = vadd.f32 %v744, %v785
  %v847 = vadd.f32 %v745, %v789
  %v848 = vadd.f32 %v746, %v789
  %v849 = vadd.f32 %v747, %v793
  %v850 = vadd.f32 %v748, %v793
  %v851 = vadd.f32 %v749, %v797
  %v852 = vadd.f32 %v750, %v797
  %v853 = vadd.f32 %v751, %v801
  %v854 = vadd.f32 %v752, %v801
  %v855 = vadd.f32 %v753, %v805
  %v856 = vadd.f32 %v754, %v805
  %v857 = vadd.f32 %v755, %v812
  %v858 = vadd.f32 %v756, %v812
  %v859 = vadd.f32 %v757, %v816
  %v860 = vadd.f32 %v758, %v816
  %v861 = vadd.f32 %v759, %v820
  %v862 = vadd.f32 %v760, %v820
  %v863 = vadd.f32 %v761, %v824
  %v864 = vadd.f32 %v762, %v824
  %v865 = vadd.f32 %v763, %v828
  %v866 = vadd.f32 %v764, %v828
  %v867 = vadd.f32 %v765, %v832
  %v868 = vadd.f32 %v766, %v832
  %v869 = vadd.f32 %v767, %v836
  %v870 = vadd.f32 %v768, %v836
  %v871 = vadd.f32 %v769, %v840
  %v872 = vadd.f32 %v770, %v840
  %873 = vst [vmem:[%s8] sm:$0xff] %v841
  %874 = vst [vmem:[%s8 + $0x8] sm:$0xff] %v842
  %875 = vst [vmem:[%s8 + $0x10] sm:$0xff] %v843
  %876 = vst [vmem:[%s8 + $0x18] sm:$0xff] %v844
  %877 = vst [vmem:[%s8 + $0x20] sm:$0xff] %v845
  %878 = vst [vmem:[%s8 + $0x28] sm:$0xff] %v846
  %879 = vst [vmem:[%s8 + $0x30] sm:$0xff] %v847
  %880 = vst [vmem:[%s8 + $0x38] sm:$0xff] %v848
  %881 = vst [vmem:[%s8 + $0x40] sm:$0xff] %v849
  %882 = vst [vmem:[%s8 + $0x48] sm:$0xff] %v850
  %883 = vst [vmem:[%s8 + $0x50] sm:$0xff] %v851
  %884 = vst [vmem:[%s8 + $0x58] sm:$0xff] %v852
  %885 = vst [vmem:[%s8 + $0x60] sm:$0xff] %v853
  %886 = vst [vmem:[%s8 + $0x68] sm:$0xff] %v854
  %887 = vst [vmem:[%s8 + $0x70] sm:$0xff] %v855
  %888 = vst [vmem:[%s8 + $0x78] sm:$0xff] %v856
  %889 = vst [vmem:[%s8 + $0x80] sm:$0xff] %v857
  %890 = vst [vmem:[%s8 + $0x88] sm:$0xff] %v858
  %891 = vst [vmem:[%s8 + $0x90] sm:$0xff] %v859
  %892 = vst [vmem:[%s8 + $0x98] sm:$0xff] %v860
  %893 = vst [vmem:[%s8 + $0xa0] sm:$0xff] %v861
  %894 = vst [vmem:[%s8 + $0xa8] sm:$0xff] %v862
  %895 = vst [vmem:[%s8 + $0xb0] sm:$0xff] %v863
  %896 = vst [vmem:[%s8 + $0xb8] sm:$0xff] %v864
  %897 = vst [vmem:[%s8 + $0xc0] sm:$0xff] %v865
  %898 = vst [vmem:[%s8 + $0xc8] sm:$0xff] %v866
  %899 = vst [vmem:[%s8 + $0xd0] sm:$0xff] %v867
  %900 = vst [vmem:[%s8 + $0xd8] sm:$0xff] %v868
  %901 = vst [vmem:[%s8 + $0xe0] sm:$0xff] %v869
  %902 = vst [vmem:[%s8 + $0xe8] sm:$0xff] %v870
  %903 = vst [vmem:[%s8 + $0xf0] sm:$0xff] %v871
  %904 = vst [vmem:[%s8 + $0xf8] sm:$0xff] %v872
  // Predicated region
  $region34: #{gc_forward.1} parent=0 // pred_check
    _
  $region35: #{gc_forward.1} parent=0 // pred_check_branch
    %906 = sbr.rel (0) target = $region37
  $region36: #{gc_forward.1} parent=0 // pred_region
    _
  $region37: #{gc_forward.1} parent=0 // pred_fallthru
    _
  // Predicated region
  $region38: #{gc_forward.1} parent=0 // pred_check
    _
  $region39: #{gc_forward.1} parent=0 // pred_check_branch
    %908 = sbr.rel (0) target = $region41
  $region40: #{gc_forward.1} parent=0 // pred_region
    _
  $region41: #{gc_forward.1} parent=0 // pred_fallthru
    _

</llo_original>
